<compile_context>
chip_gen: v7x
topology: tpu7x:2x2x1
jax: 0.10.0
libtpu: 0.0.40
codegen_flags: <defaults>
</compile_context>

<pallas_src>
import functools

import jax
import jax.numpy as jnp
from jax import lax
from jax.experimental import pallas as pl
from jax.experimental.pallas import tpu as pltpu


def _resnet_block_kernel(xp_ref, a0_ref, b0_ref, a1_ref, b1_ref, out_ref,
                         hp_ref, *, H):
    # xp_ref : (H+2, W*Cin)        y-padded input rows, channels packed in lanes
    # a0_ref : (3, W*Cin, W*Cmid)  banded conv0 weights (kx taps + x-pad folded)
    # b0_ref : (1, W*Cmid)         packed bias (f32)
    # a1_ref : (3, W*Cmid, W*Cout) banded conv1 weights
    # b1_ref : (1, W*Cout)
    # out_ref: (H, W*Cout)
    # hp_ref : VMEM scratch (H+2, W*Cmid) for the y-padded SiLU activation
    wc_mid = a0_ref.shape[-1]
    wc_out = a1_ref.shape[-1]

    # ---- conv0: 3 lane-dense banded matmuls (K = W*Cin); ky taps are
    #      sublane-shifted static slices of the padded input ref. ----
    acc0 = b0_ref[...] + jnp.zeros((H, wc_mid), jnp.float32)
    for ky in range(3):
        acc0 = acc0 + jnp.dot(xp_ref[ky:ky + H, :], a0_ref[ky],
                              preferred_element_type=jnp.float32)

    # ---- SiLU: x * sigmoid(x) (exp lands on the EUP slot) ----
    h = acc0 * (1.0 / (1.0 + jnp.exp(-acc0)))

    # ---- re-pad the SiLU activation in y inside the scratch: zero only the
    #      two boundary rows (cheap; safe under megacore grid sharding). ----
    hp_ref[0:1, :] = jnp.zeros((1, wc_mid), hp_ref.dtype)
    hp_ref[H + 1:H + 2, :] = jnp.zeros((1, wc_mid), hp_ref.dtype)
    hp_ref[1:H + 1, :] = h.astype(hp_ref.dtype)

    # ---- conv1: same 3 banded matmuls on the re-padded activation ----
    acc1 = b1_ref[...] + jnp.zeros((H, wc_out), jnp.float32)
    for ky in range(3):
        acc1 = acc1 + jnp.dot(hp_ref[ky:ky + H, :], a1_ref[ky],
                              preferred_element_type=jnp.float32)

    # ---- residual add (Cin == Cout, identical lane packing); interior rows
    #      are read straight from the padded input ref. ----
    out = acc1 + xp_ref[1:H + 1, :].astype(jnp.float32)
    out_ref[...] = out.astype(out_ref.dtype)


def _band_weights(w_hwio, W):
    """(3, 3, Ci, Co) HWIO -> (3, W*Ci, W*Co) block-banded matrices.

    A[ky][xi*Ci + ci, xo*Co + co] = w[ky, kx, ci, co] with xi = xo + kx - 1;
    out-of-range xi simply has no band entry, which implements the zero
    x-padding of a SAME 3x3 conv.
    """
    kh, kw, Ci, Co = w_hwio.shape
    mats = []
    for ky in range(kh):
        a = jnp.zeros((W * Ci, W * Co), w_hwio.dtype)
        for kx in range(kw):
            shift = jnp.eye(W, W, k=1 - kx, dtype=w_hwio.dtype)  # xo = xi+1-kx
            a = a + jnp.kron(shift, w_hwio[ky, kx])
        mats.append(a)
    return jnp.stack(mats)


def resnet_block_pallas(x_nhwc, w0_hwio, b0, w1_hwio, b1):
    """x_nhwc: (N, H, W, Cin). Weights HWIO (3, 3, Cin/out, Cout). Returns NHWC.

    MXU operand dtype follows x_nhwc.dtype (pass bf16 inputs for bf16 MXU
    operands, e.g. on v5e); accumulation is always f32.
    """
    N, H, W, Cin = x_nhwc.shape
    Cmid = w0_hwio.shape[-1]
    Cout = w1_hwio.shape[-1]
    assert Cin == Cout, "residual add requires inp_ch == out_ch"

    dt = x_nhwc.dtype

    # Pack channels into lanes -> (N, H+2, W*Cin); pad only the y axis
    # (x-padding is folded into the banded weights).
    xp = jnp.pad(x_nhwc, ((0, 0), (1, 1), (0, 0), (0, 0)))
    xp = xp.reshape(N, H + 2, W * Cin)

    a0 = _band_weights(w0_hwio.astype(dt), W)          # (3, W*Cin, W*Cmid)
    a1 = _band_weights(w1_hwio.astype(dt), W)          # (3, W*Cmid, W*Cout)
    b0p = jnp.tile(b0.astype(jnp.float32), W).reshape(1, W * Cmid)
    b1p = jnp.tile(b1.astype(jnp.float32), W).reshape(1, W * Cout)

    kernel = functools.partial(_resnet_block_kernel, H=H)

    itemsize = jnp.dtype(dt).itemsize
    cost = pl.CostEstimate(
        flops=2 * N * 3 * H * (W * Cin * W * Cmid + W * Cmid * W * Cout),
        transcendentals=N * H * W * Cmid,
        bytes_accessed=(N * (H + 2) * W * Cin + N * H * W * Cout) * itemsize
        + 3 * (W * Cin * W * Cmid + W * Cmid * W * Cout) * itemsize,
    )

    out_packed = pl.pallas_call(
        kernel,
        out_shape=jax.ShapeDtypeStruct((N, H, W * Cout), x_nhwc.dtype),
        grid_spec=pltpu.PrefetchScalarGridSpec(
            num_scalar_prefetch=0,
            grid=(N,),
            in_specs=[
                pl.BlockSpec((None, H + 2, W * Cin), lambda n: (n, 0, 0)),
                pl.BlockSpec((3, W * Cin, W * Cmid), lambda n: (0, 0, 0)),
                pl.BlockSpec((1, W * Cmid), lambda n: (0, 0)),
                pl.BlockSpec((3, W * Cmid, W * Cout), lambda n: (0, 0, 0)),
                pl.BlockSpec((1, W * Cout), lambda n: (0, 0)),
            ],
            out_specs=pl.BlockSpec((None, H, W * Cout), lambda n: (n, 0, 0)),
            scratch_shapes=[pltpu.VMEM((H + 2, W * Cmid), dt)],
        ),
        compiler_params=pltpu.CompilerParams(
            dimension_semantics=("parallel",)),
        cost_estimate=cost,
    )(xp, a0, b0p, a1, b1p)

    return out_packed.reshape(N, H, W, Cout)


def resnet_block_reference(x_nhwc, w0_hwio, b0, w1_hwio, b1):
    """Plain-JAX reference matching nn.Conv2d(k=3, s=1, p=1) semantics."""
    dn = ('NHWC', 'HWIO', 'NHWC')
    h = lax.conv_general_dilated(x_nhwc, w0_hwio, window_strides=(1, 1),
                                 padding='SAME', dimension_numbers=dn)
    h = h + b0[None, None, None, :]
    h = jax.nn.silu(h)
    y = lax.conv_general_dilated(h, w1_hwio, window_strides=(1, 1),
                                 padding='SAME', dimension_numbers=dn)
    y = y + b1[None, None, None, :]
    return x_nhwc + y


if __name__ == "__main__":
    # Small shapes consistent with the module: batch=2, channels=8, spatial=16
    # (W * C = 128 -> exactly one lane-dense vreg row per image row).
    N, C, H, W = 2, 8, 16, 16           # NCHW view (PyTorch convention)
    inp_ch = out_ch = C                  # residual add forces equality

    key = jax.random.PRNGKey(0)
    kx_, kw0, kb0, kw1, kb1 = jax.random.split(key, 5)

    # Deterministic synthetic parameters (HWIO layout == W_pt.transpose(2,3,1,0)).
    w0 = jax.random.normal(kw0, (3, 3, inp_ch, out_ch), jnp.float32) / jnp.sqrt(9.0 * inp_ch)
    b0 = jax.random.normal(kb0, (out_ch,), jnp.float32) * 0.1
    w1 = jax.random.normal(kw1, (3, 3, out_ch, out_ch), jnp.float32) / jnp.sqrt(9.0 * out_ch)
    b1 = jax.random.normal(kb1, (out_ch,), jnp.float32) * 0.1

    x_nchw = jax.random.normal(kx_, (N, C, H, W), jnp.float32)
    x_nhwc = jnp.transpose(x_nchw, (0, 2, 3, 1))   # boundary layout conversion

    out_nhwc = jax.block_until_ready(resnet_block_pallas(x_nhwc, w0, b0, w1, b1))
    out_nchw = jnp.transpose(out_nhwc, (0, 3, 1, 2))  # back to PyTorch layout

    ref_nhwc = resnet_block_reference(x_nhwc, w0, b0, w1, b1)
    assert out_nchw.shape == (N, C, H, W)
    max_err = float(jnp.max(jnp.abs(out_nhwc - ref_nhwc)))
    assert jnp.allclose(out_nhwc, ref_nhwc, atol=1e-4, rtol=1e-4), max_err

    print("KERNEL_OK")
</pallas_src>

<mosaic_0001>
module attributes {stable_mosaic.version = 11 : i64} {
  func.func @_resnet_block_kernel(%arg0: i32, %arg1: memref<1x18x128xf32, #tpu.memory_space<vmem>>, %arg2: memref<3x128x128xf32, #tpu.memory_space<vmem>>, %arg3: memref<1x128xf32, #tpu.memory_space<vmem>>, %arg4: memref<3x128x128xf32, #tpu.memory_space<vmem>>, %arg5: memref<1x128xf32, #tpu.memory_space<vmem>>, %arg6: memref<1x16x128xf32, #tpu.memory_space<vmem>>, %arg7: memref<18x128xf32, #tpu.memory_space<vmem>>) attributes {dimension_semantics = [#tpu.dimension_semantics<parallel>], iteration_bounds = array<i64: 2>, scalar_prefetch = 0 : i64, scratch_operands = 1 : i64, tpu.core_type = #tpu.core_type<tc>, window_params = [{transform_indices = @transform_0, window_bounds = array<i64: 1, 18, 128>}, {pipeline_mode = #tpu.pipeline_mode<synchronous>, transform_indices = @transform_1, window_bounds = array<i64: 3, 128, 128>}, {pipeline_mode = #tpu.pipeline_mode<synchronous>, transform_indices = @transform_2, window_bounds = array<i64: 1, 128>}, {pipeline_mode = #tpu.pipeline_mode<synchronous>, transform_indices = @transform_3, window_bounds = array<i64: 3, 128, 128>}, {pipeline_mode = #tpu.pipeline_mode<synchronous>, transform_indices = @transform_4, window_bounds = array<i64: 1, 128>}, {transform_indices = @transform_5, window_bounds = array<i64: 1, 16, 128>}]} {
    %c0 = arith.constant 0 : index
    %c0_0 = arith.constant 0 : index
    %0 = vector.load %arg3[%c0, %c0_0] : memref<1x128xf32, #tpu.memory_space<vmem>>, vector<1x128xf32>
    %cst = arith.constant 0.000000e+00 : f32
    %1 = vector.broadcast %cst : f32 to vector<16x128xf32>
    %2 = vector.broadcast %0 : vector<1x128xf32> to vector<16x128xf32>
    %3 = arith.addf %2, %1 : vector<16x128xf32>
    %c0_1 = arith.constant 0 : index
    %c0_2 = arith.constant 0 : index
    %c0_3 = arith.constant 0 : index
    %4 = vector.load %arg1[%c0_1, %c0_2, %c0_3] : memref<1x18x128xf32, #tpu.memory_space<vmem>>, vector<1x16x128xf32>
    %5 = vector.shape_cast %4 : vector<1x16x128xf32> to vector<16x128xf32>
    %c0_4 = arith.constant 0 : index
    %c0_5 = arith.constant 0 : index
    %c0_6 = arith.constant 0 : index
    %6 = vector.load %arg2[%c0_4, %c0_5, %c0_6] : memref<3x128x128xf32, #tpu.memory_space<vmem>>, vector<1x128x128xf32>
    %7 = vector.shape_cast %6 : vector<1x128x128xf32> to vector<128x128xf32>
    %cst_7 = arith.constant dense<0.000000e+00> : vector<16x128xf32>
    %8 = tpu.matmul %5, %7, %cst_7 {dimension_numbers = #tpu.dot_dimension_numbers<[1], [0], [0], [1], [0, 0, 1, 1], [], []>} : vector<16x128xf32>, vector<128x128xf32>, vector<16x128xf32> -> vector<16x128xf32>
    %9 = arith.addf %3, %8 : vector<16x128xf32>
    %c0_8 = arith.constant 0 : index
    %c1 = arith.constant 1 : index
    %c0_9 = arith.constant 0 : index
    %10 = vector.load %arg1[%c0_8, %c1, %c0_9] : memref<1x18x128xf32, #tpu.memory_space<vmem>>, vector<1x16x128xf32>
    %11 = vector.shape_cast %10 : vector<1x16x128xf32> to vector<16x128xf32>
    %c1_10 = arith.constant 1 : index
    %c0_11 = arith.constant 0 : index
    %c0_12 = arith.constant 0 : index
    %12 = vector.load %arg2[%c1_10, %c0_11, %c0_12] : memref<3x128x128xf32, #tpu.memory_space<vmem>>, vector<1x128x128xf32>
    %13 = vector.shape_cast %12 : vector<1x128x128xf32> to vector<128x128xf32>
    %cst_13 = arith.constant dense<0.000000e+00> : vector<16x128xf32>
    %14 = tpu.matmul %11, %13, %cst_13 {dimension_numbers = #tpu.dot_dimension_numbers<[1], [0], [0], [1], [0, 0, 1, 1], [], []>} : vector<16x128xf32>, vector<128x128xf32>, vector<16x128xf32> -> vector<16x128xf32>
    %15 = arith.addf %9, %14 : vector<16x128xf32>
    %c0_14 = arith.constant 0 : index
    %c2 = arith.constant 2 : index
    %c0_15 = arith.constant 0 : index
    %16 = vector.load %arg1[%c0_14, %c2, %c0_15] : memref<1x18x128xf32, #tpu.memory_space<vmem>>, vector<1x16x128xf32>
    %17 = vector.shape_cast %16 : vector<1x16x128xf32> to vector<16x128xf32>
    %c2_16 = arith.constant 2 : index
    %c0_17 = arith.constant 0 : index
    %c0_18 = arith.constant 0 : index
    %18 = vector.load %arg2[%c2_16, %c0_17, %c0_18] : memref<3x128x128xf32, #tpu.memory_space<vmem>>, vector<1x128x128xf32>
    %19 = vector.shape_cast %18 : vector<1x128x128xf32> to vector<128x128xf32>
    %cst_19 = arith.constant dense<0.000000e+00> : vector<16x128xf32>
    %20 = tpu.matmul %17, %19, %cst_19 {dimension_numbers = #tpu.dot_dimension_numbers<[1], [0], [0], [1], [0, 0, 1, 1], [], []>} : vector<16x128xf32>, vector<128x128xf32>, vector<16x128xf32> -> vector<16x128xf32>
    %21 = arith.addf %15, %20 : vector<16x128xf32>
    %cst_20 = arith.constant 0.000000e+00 : f32
    %22 = vector.broadcast %cst_20 : f32 to vector<16x128xf32>
    %23 = arith.subf %22, %21 : vector<16x128xf32>
    %24 = math.exp %23 : vector<16x128xf32>
    %cst_21 = arith.constant 1.000000e+00 : f32
    %25 = vector.broadcast %cst_21 : f32 to vector<16x128xf32>
    %26 = arith.addf %25, %24 : vector<16x128xf32>
    %cst_22 = arith.constant 1.000000e+00 : f32
    %27 = vector.broadcast %cst_22 : f32 to vector<16x128xf32>
    %28 = arith.divf %27, %26 : vector<16x128xf32>
    %29 = arith.mulf %21, %28 : vector<16x128xf32>
    %cst_23 = arith.constant 0.000000e+00 : f32
    %30 = vector.broadcast %cst_23 : f32 to vector<1x128xf32>
    %c0_24 = arith.constant 0 : index
    %c0_25 = arith.constant 0 : index
    %31 = vector.load %arg7[%c0_24, %c0_25] : memref<18x128xf32, #tpu.memory_space<vmem>>, vector<1x128xf32>
    tpu.vector_store %arg7[%c0_24, %c0_25], %30 {strides = array<i32>} : memref<18x128xf32, #tpu.memory_space<vmem>>, vector<1x128xf32>,
    %cst_26 = arith.constant 0.000000e+00 : f32
    %32 = vector.broadcast %cst_26 : f32 to vector<1x128xf32>
    %c17 = arith.constant 17 : index
    %c0_27 = arith.constant 0 : index
    %33 = vector.load %arg7[%c17, %c0_27] : memref<18x128xf32, #tpu.memory_space<vmem>>, vector<1x128xf32>
    tpu.vector_store %arg7[%c17, %c0_27], %32 {strides = array<i32>} : memref<18x128xf32, #tpu.memory_space<vmem>>, vector<1x128xf32>,
    %c1_28 = arith.constant 1 : index
    %c0_29 = arith.constant 0 : index
    %34 = vector.load %arg7[%c1_28, %c0_29] : memref<18x128xf32, #tpu.memory_space<vmem>>, vector<16x128xf32>
    tpu.vector_store %arg7[%c1_28, %c0_29], %29 {strides = array<i32>} : memref<18x128xf32, #tpu.memory_space<vmem>>, vector<16x128xf32>,
    %c0_30 = arith.constant 0 : index
    %c0_31 = arith.constant 0 : index
    %35 = vector.load %arg5[%c0_30, %c0_31] : memref<1x128xf32, #tpu.memory_space<vmem>>, vector<1x128xf32>
    %cst_32 = arith.constant 0.000000e+00 : f32
    %36 = vector.broadcast %cst_32 : f32 to vector<16x128xf32>
    %37 = vector.broadcast %35 : vector<1x128xf32> to vector<16x128xf32>
    %38 = arith.addf %37, %36 : vector<16x128xf32>
    %c0_33 = arith.constant 0 : index
    %c0_34 = arith.constant 0 : index
    %39 = vector.load %arg7[%c0_33, %c0_34] : memref<18x128xf32, #tpu.memory_space<vmem>>, vector<16x128xf32>
    %c0_35 = arith.constant 0 : index
    %c0_36 = arith.constant 0 : index
    %c0_37 = arith.constant 0 : index
    %40 = vector.load %arg4[%c0_35, %c0_36, %c0_37] : memref<3x128x128xf32, #tpu.memory_space<vmem>>, vector<1x128x128xf32>
    %41 = vector.shape_cast %40 : vector<1x128x128xf32> to vector<128x128xf32>
    %cst_38 = arith.constant dense<0.000000e+00> : vector<16x128xf32>
    %42 = tpu.matmul %39, %41, %cst_38 {dimension_numbers = #tpu.dot_dimension_numbers<[1], [0], [0], [1], [0, 0, 1, 1], [], []>} : vector<16x128xf32>, vector<128x128xf32>, vector<16x128xf32> -> vector<16x128xf32>
    %43 = arith.addf %38, %42 : vector<16x128xf32>
    %c1_39 = arith.constant 1 : index
    %c0_40 = arith.constant 0 : index
    %44 = vector.load %arg7[%c1_39, %c0_40] : memref<18x128xf32, #tpu.memory_space<vmem>>, vector<16x128xf32>
    %c1_41 = arith.constant 1 : index
    %c0_42 = arith.constant 0 : index
    %c0_43 = arith.constant 0 : index
    %45 = vector.load %arg4[%c1_41, %c0_42, %c0_43] : memref<3x128x128xf32, #tpu.memory_space<vmem>>, vector<1x128x128xf32>
    %46 = vector.shape_cast %45 : vector<1x128x128xf32> to vector<128x128xf32>
    %cst_44 = arith.constant dense<0.000000e+00> : vector<16x128xf32>
    %47 = tpu.matmul %44, %46, %cst_44 {dimension_numbers = #tpu.dot_dimension_numbers<[1], [0], [0], [1], [0, 0, 1, 1], [], []>} : vector<16x128xf32>, vector<128x128xf32>, vector<16x128xf32> -> vector<16x128xf32>
    %48 = arith.addf %43, %47 : vector<16x128xf32>
    %c2_45 = arith.constant 2 : index
    %c0_46 = arith.constant 0 : index
    %49 = vector.load %arg7[%c2_45, %c0_46] : memref<18x128xf32, #tpu.memory_space<vmem>>, vector<16x128xf32>
    %c2_47 = arith.constant 2 : index
    %c0_48 = arith.constant 0 : index
    %c0_49 = arith.constant 0 : index
    %50 = vector.load %arg4[%c2_47, %c0_48, %c0_49] : memref<3x128x128xf32, #tpu.memory_space<vmem>>, vector<1x128x128xf32>
    %51 = vector.shape_cast %50 : vector<1x128x128xf32> to vector<128x128xf32>
    %cst_50 = arith.constant dense<0.000000e+00> : vector<16x128xf32>
    %52 = tpu.matmul %49, %51, %cst_50 {dimension_numbers = #tpu.dot_dimension_numbers<[1], [0], [0], [1], [0, 0, 1, 1], [], []>} : vector<16x128xf32>, vector<128x128xf32>, vector<16x128xf32> -> vector<16x128xf32>
    %53 = arith.addf %48, %52 : vector<16x128xf32>
    %c0_51 = arith.constant 0 : index
    %c1_52 = arith.constant 1 : index
    %c0_53 = arith.constant 0 : index
    %54 = vector.load %arg1[%c0_51, %c1_52, %c0_53] : memref<1x18x128xf32, #tpu.memory_space<vmem>>, vector<1x16x128xf32>
    %55 = vector.shape_cast %54 : vector<1x16x128xf32> to vector<16x128xf32>
    %56 = arith.addf %53, %55 : vector<16x128xf32>
    %c0_54 = arith.constant 0 : index
    %c0_55 = arith.constant 0 : index
    %c0_56 = arith.constant 0 : index
    %57 = vector.load %arg6[%c0_54, %c0_55, %c0_56] : memref<1x16x128xf32, #tpu.memory_space<vmem>>, vector<1x16x128xf32>
    %58 = vector.shape_cast %57 : vector<1x16x128xf32> to vector<16x128xf32>
    %59 = vector.shape_cast %56 : vector<16x128xf32> to vector<1x16x128xf32>
    tpu.vector_store %arg6[%c0_54, %c0_55, %c0_56], %59 {strides = array<i32>} : memref<1x16x128xf32, #tpu.memory_space<vmem>>, vector<1x16x128xf32>,
    return
  }
  func.func @transform_0(%arg0: i32) -> (i32, i32, i32) {
    %c0_i32 = arith.constant 0 : i32
    %c0_i32_0 = arith.constant 0 : i32
    %c0_i32_1 = arith.constant 0 : i32
    return %arg0, %c0_i32, %c0_i32_0 : i32, i32, i32
  }
  func.func @transform_1(%arg0: i32) -> (i32, i32, i32) {
    %c0_i32 = arith.constant 0 : i32
    %c0_i32_0 = arith.constant 0 : i32
    %c0_i32_1 = arith.constant 0 : i32
    %c0_i32_2 = arith.constant 0 : i32
    return %c0_i32, %c0_i32_0, %c0_i32_1 : i32, i32, i32
  }
  func.func @transform_2(%arg0: i32) -> (i32, i32) {
    %c0_i32 = arith.constant 0 : i32
    %c0_i32_0 = arith.constant 0 : i32
    %c0_i32_1 = arith.constant 0 : i32
    return %c0_i32, %c0_i32_0 : i32, i32
  }
  func.func @transform_3(%arg0: i32) -> (i32, i32, i32) {
    %c0_i32 = arith.constant 0 : i32
    %c0_i32_0 = arith.constant 0 : i32
    %c0_i32_1 = arith.constant 0 : i32
    %c0_i32_2 = arith.constant 0 : i32
    return %c0_i32, %c0_i32_0, %c0_i32_1 : i32, i32, i32
  }
  func.func @transform_4(%arg0: i32) -> (i32, i32) {
    %c0_i32 = arith.constant 0 : i32
    %c0_i32_0 = arith.constant 0 : i32
    %c0_i32_1 = arith.constant 0 : i32
    return %c0_i32, %c0_i32_0 : i32, i32
  }
  func.func @transform_5(%arg0: i32) -> (i32, i32, i32) {
    %c0_i32 = arith.constant 0 : i32
    %c0_i32_0 = arith.constant 0 : i32
    %c0_i32_1 = arith.constant 0 : i32
    return %arg0, %c0_i32, %c0_i32_0 : i32, i32, i32
  }
}

</mosaic_0001>

<llo_original>
// kernel: tpu_custom_call.1
$region0: #{tpu_custom_call.1}
  #allocation0 [shape = 'u32[]', space=smem, size = 0x4, offset = 0x4, fixed_abs, tag = 'smem constant byte address 0x4 - core index']
  #allocation1 [shape = 'u32[144,128]{1,0:T(1,128)}', space=vmem, size = 0x12000, scoped, tag = 'internal scratch']
  #allocation2 [shape = 'f32[18,128]{1,0:T(8,128)}', space=vmem, size = 0x3000, scoped, tag = 'scratch operand']
  %s0 = inlined_call_operand.vmem [shape: f32[2,18,128], index: 0, kind: input, shape index: {}]
  %s1 = inlined_call_operand.hbm [shape: f32[3,128,128], index: 1, kind: input, shape index: {}]
  %s2 = inlined_call_operand.vmem [shape: f32[1,128], index: 2, kind: input, shape index: {}]
  %s3 = inlined_call_operand.hbm [shape: f32[3,128,128], index: 3, kind: input, shape index: {}]
  %s4 = inlined_call_operand.vmem [shape: f32[1,128], index: 4, kind: input, shape index: {}]
  %s5 = inlined_call_operand.hbm [shape: f32[2,16,128], index: 5, kind: output, shape index: {}]
  %s6 = sld [smem:[#allocation0]]
  $region61: #{tpu_custom_call.1} parent=0
    _
  %s8 = ssub.s32 1, %s6
  %s9 = scalar_select 0, %s8, %s6
  $region1: #{tpu_custom_call.1} parent=0
    #allocation3 [shape = 'u8[196608]{0}', space=vmem, size = 0x30000, scoped, tag = 'input window, operand 1, single buffered']
    #allocation4 [shape = 's32[2]{0}', space=sflag, size = 0x8, scoped, tag = 'scoped memory for tpu_custom_call.1']
    #allocation5 [shape = 's32[2]{0}', space=sflag, size = 0x8, scoped, tag = 'scoped memory for tpu_custom_call.1']
    #allocation6 [shape = 'u8[196608]{0}', space=vmem, size = 0x30000, scoped, tag = 'input window, operand 3, single buffered']
    #allocation7 [shape = 's32[1]{0}', space=sflag, size = 0x4, scoped, tag = 'scoped memory for tpu_custom_call.1']
    #allocation8 [shape = 'u8[16384]{0}', space=vmem, size = 0x4000, scoped, tag = 'output window, operand 0']
    %10 = vsyncpa [#allocation4], 0
    %11 = vsyncpa [#allocation7], 0
    %12 = vsyncpa [#allocation5], 0
    %s13 = scalar_lea.sflag [#allocation5], 1
    %14 = vsyncpa %s13, 0
    loop: start=0, step=1, limit=4
    $region2: #{tpu_custom_call.1} parent=1 // loop_pre_header
      _
    $region3: #{tpu_custom_call.1} parent=1 // loop_header
      %s16 = sphi 0, %s20
      %p17 = scmp.ge.s32.totalorder %s16, 4
      %s26 = sphi 0, %s28
      %s29 = sphi 0, %s26
      %s30 = sphi 0, %s29
      %s46 = sphi 0, %s30
      %s50 = sphi 0, %s50
      %s52 = sphi 0, %s50
      %s53 = sphi 0, %s52
      %s67 = sphi 0, %s53
      %s71 = sphi 0, %s71
      %s73 = sphi 0, %s71
      %s74 = sphi 0, %s73
      %s88 = sphi 0, %s74
      %s92 = sphi 0, %s92
      %s94 = sphi 0, %s92
      %s95 = sphi 0, %s94
      %s109 = sphi 0, %s95
      %s113 = sphi 0, %s113
      %s115 = sphi 0, %s113
      %s116 = sphi 0, %s115
      %s130 = sphi 0, %s116
      %s136 = sphi 0, %s138
      %s139 = sphi 0, %s136
      %s140 = sphi 0, %s139
      %s156 = sphi 0, %s140
    $region4: #{tpu_custom_call.1} parent=1 // loop_header_branch
      %19 = sbr.rel (%p17) target = $region8
    $region5: #{tpu_custom_call.1} parent=1 // loop_body
      %s21 = ssub.s32 %s16, 1
      %s22 = ssub.s32 %s16, 2
      %s23 = sadd.s32 %s16, 1
      %s24 = ssub.s32 %s16, %s23
      %p25 = scmp.eq.s32.totalorder %s24, 0
      %s27 = sadd.s32 %s26, 1
      %s28 = scalar_select %p25, %s26, %s27
      %p31 = pneg %p25
      %p32 = scmp.eq.s32.totalorder %s16, 1
      %p33 = por %p31, %p32
      %p34 = scmp.ne.s32.totalorder %s26, %s29
      %p35 = scmp.eq.s32.totalorder %s16, 0
      %p36 = por %p34, %p35
      %p37 = scmp.ne.s32.totalorder %s26, %s29
      %p38 = scmp.eq.s32.totalorder %s21, 1
      %p39 = por %p37, %p38
      %p40 = scmp.ne.s32.totalorder %s29, %s30
      %p41 = scmp.eq.s32.totalorder %s21, 0
      %p42 = por %p40, %p41
      %p43 = scmp.ne.s32.totalorder %s29, %s30
      %p44 = scmp.eq.s32.totalorder %s22, 1
      %p45 = por %p43, %p44
      %p47 = scmp.ne.s32.totalorder %s30, %s46
      %p48 = scmp.eq.s32.totalorder %s22, 0
      %p49 = por %p47, %p48
      %s51 = sadd.s32 %s50, 1
      %p54 = scmp.eq.s32.totalorder %s16, 1
      %p55 = scmp.ne.s32.totalorder %s50, %s52
      %p56 = scmp.eq.s32.totalorder %s16, 0
      %p57 = por %p55, %p56
      %p58 = scmp.ne.s32.totalorder %s50, %s52
      %p59 = scmp.eq.s32.totalorder %s21, 1
      %p60 = por %p58, %p59
      %p61 = scmp.ne.s32.totalorder %s52, %s53
      %p62 = scmp.eq.s32.totalorder %s21, 0
      %p63 = por %p61, %p62
      %p64 = scmp.ne.s32.totalorder %s52, %s53
      %p65 = scmp.eq.s32.totalorder %s22, 1
      %p66 = por %p64, %p65
      %p68 = scmp.ne.s32.totalorder %s53, %s67
      %p69 = scmp.eq.s32.totalorder %s22, 0
      %p70 = por %p68, %p69
      %s72 = sadd.s32 %s71, 1
      %p75 = scmp.eq.s32.totalorder %s16, 1
      %p76 = scmp.ne.s32.totalorder %s71, %s73
      %p77 = scmp.eq.s32.totalorder %s16, 0
      %p78 = por %p76, %p77
      %p79 = scmp.ne.s32.totalorder %s71, %s73
      %p80 = scmp.eq.s32.totalorder %s21, 1
      %p81 = por %p79, %p80
      %p82 = scmp.ne.s32.totalorder %s73, %s74
      %p83 = scmp.eq.s32.totalorder %s21, 0
      %p84 = por %p82, %p83
      %p85 = scmp.ne.s32.totalorder %s73, %s74
      %p86 = scmp.eq.s32.totalorder %s22, 1
      %p87 = por %p85, %p86
      %p89 = scmp.ne.s32.totalorder %s74, %s88
      %p90 = scmp.eq.s32.totalorder %s22, 0
      %p91 = por %p89, %p90
      %s93 = sadd.s32 %s92, 1
      %p96 = scmp.eq.s32.totalorder %s16, 1
      %p97 = scmp.ne.s32.totalorder %s92, %s94
      %p98 = scmp.eq.s32.totalorder %s16, 0
      %p99 = por %p97, %p98
      %p100 = scmp.ne.s32.totalorder %s92, %s94
      %p101 = scmp.eq.s32.totalorder %s21, 1
      %p102 = por %p100, %p101
      %p103 = scmp.ne.s32.totalorder %s94, %s95
      %p104 = scmp.eq.s32.totalorder %s21, 0
      %p105 = por %p103, %p104
      %p106 = scmp.ne.s32.totalorder %s94, %s95
      %p107 = scmp.eq.s32.totalorder %s22, 1
      %p108 = por %p106, %p107
      %p110 = scmp.ne.s32.totalorder %s95, %s109
      %p111 = scmp.eq.s32.totalorder %s22, 0
      %p112 = por %p110, %p111
      %s114 = sadd.s32 %s113, 1
      %p117 = scmp.eq.s32.totalorder %s16, 1
      %p118 = scmp.ne.s32.totalorder %s113, %s115
      %p119 = scmp.eq.s32.totalorder %s16, 0
      %p120 = por %p118, %p119
      %p121 = scmp.ne.s32.totalorder %s113, %s115
      %p122 = scmp.eq.s32.totalorder %s21, 1
      %p123 = por %p121, %p122
      %p124 = scmp.ne.s32.totalorder %s115, %s116
      %p125 = scmp.eq.s32.totalorder %s21, 0
      %p126 = por %p124, %p125
      %p127 = scmp.ne.s32.totalorder %s115, %s116
      %p128 = scmp.eq.s32.totalorder %s22, 1
      %p129 = por %p127, %p128
      %p131 = scmp.ne.s32.totalorder %s116, %s130
      %p132 = scmp.eq.s32.totalorder %s22, 0
      %p133 = por %p131, %p132
      %s134 = ssub.s32 %s16, %s23
      %p135 = scmp.eq.s32.totalorder %s134, 0
      %s137 = sadd.s32 %s136, 1
      %s138 = scalar_select %p135, %s136, %s137
      %p141 = pneg %p135
      %p142 = scmp.eq.s32.totalorder %s16, 1
      %p143 = por %p141, %p142
      %p144 = scmp.ne.s32.totalorder %s136, %s139
      %p145 = scmp.eq.s32.totalorder %s16, 0
      %p146 = por %p144, %p145
      %p147 = scmp.ne.s32.totalorder %s136, %s139
      %p148 = scmp.eq.s32.totalorder %s21, 1
      %p149 = por %p147, %p148
      %p150 = scmp.ne.s32.totalorder %s139, %s140
      %p151 = scmp.eq.s32.totalorder %s21, 0
      %p152 = por %p150, %p151
      %p153 = scmp.ne.s32.totalorder %s139, %s140
      %p154 = scmp.eq.s32.totalorder %s22, 1
      %p155 = por %p153, %p154
      %p157 = scmp.ne.s32.totalorder %s140, %s156
      %p158 = scmp.eq.s32.totalorder %s22, 0
      %p159 = por %p157, %p158
      %p160 = scmp.le.s32.totalorder 1, %s16
      %p161 = scmp.lt.s32.totalorder %s16, 3
      %p162 = pnand %p160, %p161
      %p163 = pneg %p162
      // Predicated region
      $region9: #{tpu_custom_call.1} parent=5 // pred_check
        _
      $region10: #{tpu_custom_call.1} parent=5 // pred_check_branch
        %165 = sbr.rel (%p162) target = $region12
      $region11: #{tpu_custom_call.1} parent=5 // pred_region
        %s166 = ssub.s32 %s16, 1
        // Predicated region
        $region13: #{tpu_custom_call.1} parent=11 // pred_check
          %p167 = pneg %p63
        $region14: #{tpu_custom_call.1} parent=11 // pred_check_branch
          %169 = sbr.rel (%p167) target = $region16
        $region15: #{tpu_custom_call.1} parent=11 // pred_region
          %s171 = ssub.s32 6144, 6144
          %172 = vsyncadd [#allocation4], %s171
          %s173 = sshll.u32 [#allocation3], 4
          %s174 = int_to_ptr.vmem [resolvable:$true] %s173
          %179 = dma.hbm_to_vmem [thread:$0]  %s1, 6144, %s174, [#allocation4], 128, 128, 8
        $region16: #{tpu_custom_call.1} parent=11 // pred_fallthru
          _
        // Predicated region
        $region17: #{tpu_custom_call.1} parent=11 // pred_check
          %p180 = pneg %p84
        $region18: #{tpu_custom_call.1} parent=11 // pred_check_branch
          %182 = sbr.rel (%p180) target = $region20
        $region19: #{tpu_custom_call.1} parent=11 // pred_region
          _
        $region20: #{tpu_custom_call.1} parent=11 // pred_fallthru
          _
        // Predicated region
        $region21: #{tpu_custom_call.1} parent=11 // pred_check
          %p183 = pneg %p105
        $region22: #{tpu_custom_call.1} parent=11 // pred_check_branch
          %185 = sbr.rel (%p183) target = $region24
        $region23: #{tpu_custom_call.1} parent=11 // pred_region
          %s187 = ssub.s32 6144, 6144
          %188 = vsyncadd [#allocation7], %s187
          %s189 = sshll.u32 [#allocation6], 4
          %s190 = int_to_ptr.vmem [resolvable:$true] %s189
          %195 = dma.hbm_to_vmem [thread:$0]  %s3, 6144, %s190, [#allocation7], 128, 128, 8
        $region24: #{tpu_custom_call.1} parent=11 // pred_fallthru
          _
        // Predicated region
        $region25: #{tpu_custom_call.1} parent=11 // pred_check
          %p196 = pneg %p126
        $region26: #{tpu_custom_call.1} parent=11 // pred_check_branch
          %198 = sbr.rel (%p196) target = $region28
        $region27: #{tpu_custom_call.1} parent=11 // pred_region
          _
        $region28: #{tpu_custom_call.1} parent=11 // pred_fallthru
          _
      $region12: #{tpu_custom_call.1} parent=5 // pred_fallthru
        _
      %p199 = scmp.lt.s32.totalorder %s16, 2
      // Predicated region
      $region29: #{tpu_custom_call.1} parent=5 // pred_check
        %p200 = pneg %p199
      $region30: #{tpu_custom_call.1} parent=5 // pred_check_branch
        %202 = sbr.rel (%p200) target = $region32
      $region31: #{tpu_custom_call.1} parent=5 // pred_region
        // Predicated region
        $region33: #{tpu_custom_call.1} parent=31 // pred_check
          %p203 = pneg %p36
        $region34: #{tpu_custom_call.1} parent=31 // pred_check_branch
          %205 = sbr.rel (%p203) target = $region36
        $region35: #{tpu_custom_call.1} parent=31 // pred_region
          %p206 = scmp.lt.s32.totalorder %s16, 1
          %s207 = scalar_select %p206, %s16, 1
          %s208 = smul.addr %s207, 3
          %s209 = smul.addr %s208, 8
          %s210 = scalar_lea.vmem %s0, %s209
        $region36: #{tpu_custom_call.1} parent=31 // pred_fallthru
          _
      $region32: #{tpu_custom_call.1} parent=5 // pred_fallthru
        _
      %p211 = scmp.le.s32.totalorder 1, %s16
      %p212 = scmp.lt.s32.totalorder %s16, 3
      %p213 = pnand %p211, %p212
      %p214 = pneg %p213
      // Predicated region
      $region37: #{tpu_custom_call.1} parent=5 // pred_check
        _
      $region38: #{tpu_custom_call.1} parent=5 // pred_check_branch
        %216 = sbr.rel (%p213) target = $region40
      $region39: #{tpu_custom_call.1} parent=5 // pred_region
        %s217 = ssub.s32 %s16, 1
        // Predicated region
        $region41: #{tpu_custom_call.1} parent=39 // pred_check
          %p218 = pneg %p63
        $region42: #{tpu_custom_call.1} parent=39 // pred_check_branch
          %220 = sbr.rel (%p218) target = $region44
        $region43: #{tpu_custom_call.1} parent=39 // pred_region
          %221 = dma.done [#allocation4], 6144
        $region44: #{tpu_custom_call.1} parent=39 // pred_fallthru
          _
        // Predicated region
        $region45: #{tpu_custom_call.1} parent=39 // pred_check
          %p222 = pneg %p105
        $region46: #{tpu_custom_call.1} parent=39 // pred_check_branch
          %224 = sbr.rel (%p222) target = $region48
        $region47: #{tpu_custom_call.1} parent=39 // pred_region
          %225 = dma.done [#allocation7], 6144
        $region48: #{tpu_custom_call.1} parent=39 // pred_fallthru
          _
        %p226 = scmp.lt.s32.totalorder %s21, 1
        %s227 = scalar_select %p226, %s21, 1
        %s228 = smul.addr %s227, 3
        %s229 = smul.addr %s228, 8
        %s230 = scalar_lea.vmem %s0, %s229
        %p231 = pneg %p42
        %p232 = pneg %p39
        %p233 = pneg %p63
        %p234 = pneg %p60
        %p235 = pneg %p84
        %p236 = pneg %p81
        %p237 = pneg %p105
        %p238 = pneg %p102
        %p239 = pneg %p126
        %p240 = pneg %p123
        %p241 = pneg %p152
        %p242 = pneg %p149
        %s243 = sand.u32 %s139, 1
        %s244 = scalar_lea.sflag [#allocation5], %s243
        %s245 = sand.u32 %s139, 1
        %s246 = smul.addr %s245, 16
        %s247 = scalar_lea.vmem [#allocation8], %s246
        %p248 = scmp.lt.s32.totalorder %s21, 1
        %s249 = scalar_select %p248, %s21, 1
        %s250 = smul.addr %s249, 3
        %s251 = smul.addr %s250, 8
        %s252 = scalar_lea.vmem %s0, %s251
        %v253 = vld [vmem:[%s2] sm:$0x1]
        %v255 = vlaneseq
        %v256 = vshrl.u32 %v255, 7
        %v257 = vsub.s32 0, %v256
        %v258 = vrot.slane %v253, %v257
        %v260 = vadd.f32 %v258, 0.0
        %v261 = vld [vmem:[%s252] sm:$0xff]
        %v262 = vld [vmem:[%s252 + $0x8] sm:$0xff]
        %v263 = vld [vmem:[#allocation3] sm:$0xff]
        %v264 = vld [vmem:[#allocation3 + $0x8] sm:$0xff]
        %v265 = vld [vmem:[#allocation3 + $0x10] sm:$0xff]
        %v266 = vld [vmem:[#allocation3 + $0x18] sm:$0xff]
        %v267 = vld [vmem:[#allocation3 + $0x20] sm:$0xff]
        %v268 = vld [vmem:[#allocation3 + $0x28] sm:$0xff]
        %v269 = vld [vmem:[#allocation3 + $0x30] sm:$0xff]
        %v270 = vld [vmem:[#allocation3 + $0x38] sm:$0xff]
        %v271 = vld [vmem:[#allocation3 + $0x40] sm:$0xff]
        %v272 = vld [vmem:[#allocation3 + $0x48] sm:$0xff]
        %v273 = vld [vmem:[#allocation3 + $0x50] sm:$0xff]
        %v274 = vld [vmem:[#allocation3 + $0x58] sm:$0xff]
        %v275 = vld [vmem:[#allocation3 + $0x60] sm:$0xff]
        %v276 = vld [vmem:[#allocation3 + $0x68] sm:$0xff]
        %v277 = vld [vmem:[#allocation3 + $0x70] sm:$0xff]
        %v278 = vld [vmem:[#allocation3 + $0x78] sm:$0xff]
        %279 = vmatprep.subr.mxu0 0.0
        %280 = vmatpush1.msra.mxu0 %v263
        %281 = vmatprep.subr.mxu0 0.0
        %282 = vmatpush1.msra.mxu0 %v264
        %283 = vmatprep.subr.mxu0 0.0
        %284 = vmatpush1.msra.mxu0 %v265
        %285 = vmatprep.subr.mxu0 0.0
        %286 = vmatpush1.msra.mxu0 %v266
        %287 = vmatprep.subr.mxu0 0.0
        %288 = vmatpush1.msra.mxu0 %v267
        %289 = vmatprep.subr.mxu0 0.0
        %290 = vmatpush1.msra.mxu0 %v268
        %291 = vmatprep.subr.mxu0 0.0
        %292 = vmatpush1.msra.mxu0 %v269
        %293 = vmatprep.subr.mxu0 0.0
        %294 = vmatpush1.msra.mxu0 %v270
        %295 = vmatprep.subr.mxu0 0.0
        %296 = vmatpush1.msra.mxu0 %v271
        %297 = vmatprep.subr.mxu0 0.0
        %298 = vmatpush1.msra.mxu0 %v272
        %299 = vmatprep.subr.mxu0 0.0
        %300 = vmatpush1.msra.mxu0 %v273
        %301 = vmatprep.subr.mxu0 0.0
        %302 = vmatpush1.msra.mxu0 %v274
        %303 = vmatprep.subr.mxu0 0.0
        %304 = vmatpush1.msra.mxu0 %v275
        %305 = vmatprep.subr.mxu0 0.0
        %306 = vmatpush1.msra.mxu0 %v276
        %307 = vmatprep.subr.mxu0 0.0
        %308 = vmatpush1.msra.mxu0 %v277
        %309 = vmatprep.subr.mxu0 0.0
        %310 = vmatpush1.msra.mxu0 %v278
        %311 = vmatprep.subr.mxu0 0.0
        %312 = vmatpush1.msra.mxu0 0.0
        %313 = vmatprep.subr.mxu0 0.0
        %314 = vmatpush1.msra.mxu0 0.0
        %315 = vmatprep.subr.mxu0 0.0
        %316 = vmatpush1.msra.mxu0 0.0
        %317 = vmatprep.subr.mxu0 0.0
        %318 = vmatpush1.msra.mxu0 0.0
        %319 = vmatprep.subr.mxu0 0.0
        %320 = vmatpush1.msra.mxu0 0.0
        %321 = vmatprep.subr.mxu0 0.0
        %322 = vmatpush1.msra.mxu0 0.0
        %323 = vmatprep.subr.mxu0 0.0
        %324 = vmatpush1.msra.mxu0 0.0
        %325 = vmatprep.subr.mxu0 0.0
        %326 = vmatpush1.msra.mxu0 0.0
        %327 = vmatprep.subr.mxu0 0.0
        %328 = vmatpush1.msra.mxu0 0.0
        %329 = vmatprep.subr.mxu0 0.0
        %330 = vmatpush1.msra.mxu0 0.0
        %331 = vmatprep.subr.mxu0 0.0
        %332 = vmatpush1.msra.mxu0 0.0
        %333 = vmatprep.subr.mxu0 0.0
        %334 = vmatpush1.msra.mxu0 0.0
        %335 = vmatprep.subr.mxu0 0.0
        %336 = vmatpush1.msra.mxu0 0.0
        %337 = vmatprep.subr.mxu0 0.0
        %338 = vmatpush1.msra.mxu0 0.0
        %339 = vmatprep.subr.mxu0 0.0
        %340 = vmatpush1.msra.mxu0 0.0
        %341 = vmatprep.subr.mxu0 0.0
        %342 = vmatpush1.msra.mxu0 0.0
        %343 = vmatprep.mubr.f32.mxu0 0.0
        %344 = vmatmul.mubr.f32.gmra.mrb[0].mxu0 %v261
        %v345 = vpop.f32.mrb[0].mxu0
        %v346 = vadd.f32 0.0, %v345
        %v347 = vpop.f32.mrb[0].mxu0
        %348 = vmatprep.mubr.f32.mxu0 0.0
        %349 = vmatmul.mubr.f32.gmra.mrb[0].mxu0 %v262
        %v350 = vpop.f32.mrb[0].mxu0
        %v351 = vadd.f32 0.0, %v350
        %v352 = vpop.f32.mrb[0].mxu0
        %353 = vdwg.mxu0
        %v354 = vadd.f32 %v260, %v346
        %v355 = vadd.f32 %v260, %v351
        %v356 = vld [vmem:[%s252 + $0x1] sm:$0xff]
        %v357 = vld [vmem:[%s252 + $0x9] sm:$0xff]
        %s358 = scalar_lea.vmem [#allocation3], 128
        %v359 = vld [vmem:[%s358] sm:$0xff]
        %v360 = vld [vmem:[%s358 + $0x8] sm:$0xff]
        %v361 = vld [vmem:[%s358 + $0x10] sm:$0xff]
        %v362 = vld [vmem:[%s358 + $0x18] sm:$0xff]
        %v363 = vld [vmem:[%s358 + $0x20] sm:$0xff]
        %v364 = vld [vmem:[%s358 + $0x28] sm:$0xff]
        %v365 = vld [vmem:[%s358 + $0x30] sm:$0xff]
        %v366 = vld [vmem:[%s358 + $0x38] sm:$0xff]
        %v367 = vld [vmem:[%s358 + $0x40] sm:$0xff]
        %v368 = vld [vmem:[%s358 + $0x48] sm:$0xff]
        %v369 = vld [vmem:[%s358 + $0x50] sm:$0xff]
        %v370 = vld [vmem:[%s358 + $0x58] sm:$0xff]
        %v371 = vld [vmem:[%s358 + $0x60] sm:$0xff]
        %v372 = vld [vmem:[%s358 + $0x68] sm:$0xff]
        %v373 = vld [vmem:[%s358 + $0x70] sm:$0xff]
        %v374 = vld [vmem:[%s358 + $0x78] sm:$0xff]
        %375 = vmatprep.subr.mxu0 0.0
        %376 = vmatpush1.msra.mxu0 %v359
        %377 = vmatprep.subr.mxu0 0.0
        %378 = vmatpush1.msra.mxu0 %v360
        %379 = vmatprep.subr.mxu0 0.0
        %380 = vmatpush1.msra.mxu0 %v361
        %381 = vmatprep.subr.mxu0 0.0
        %382 = vmatpush1.msra.mxu0 %v362
        %383 = vmatprep.subr.mxu0 0.0
        %384 = vmatpush1.msra.mxu0 %v363
        %385 = vmatprep.subr.mxu0 0.0
        %386 = vmatpush1.msra.mxu0 %v364
        %387 = vmatprep.subr.mxu0 0.0
        %388 = vmatpush1.msra.mxu0 %v365
        %389 = vmatprep.subr.mxu0 0.0
        %390 = vmatpush1.msra.mxu0 %v366
        %391 = vmatprep.subr.mxu0 0.0
        %392 = vmatpush1.msra.mxu0 %v367
        %393 = vmatprep.subr.mxu0 0.0
        %394 = vmatpush1.msra.mxu0 %v368
        %395 = vmatprep.subr.mxu0 0.0
        %396 = vmatpush1.msra.mxu0 %v369
        %397 = vmatprep.subr.mxu0 0.0
        %398 = vmatpush1.msra.mxu0 %v370
        %399 = vmatprep.subr.mxu0 0.0
        %400 = vmatpush1.msra.mxu0 %v371
        %401 = vmatprep.subr.mxu0 0.0
        %402 = vmatpush1.msra.mxu0 %v372
        %403 = vmatprep.subr.mxu0 0.0
        %404 = vmatpush1.msra.mxu0 %v373
        %405 = vmatprep.subr.mxu0 0.0
        %406 = vmatpush1.msra.mxu0 %v374
        %407 = vmatprep.subr.mxu0 0.0
        %408 = vmatpush1.msra.mxu0 0.0
        %409 = vmatprep.subr.mxu0 0.0
        %410 = vmatpush1.msra.mxu0 0.0
        %411 = vmatprep.subr.mxu0 0.0
        %412 = vmatpush1.msra.mxu0 0.0
        %413 = vmatprep.subr.mxu0 0.0
        %414 = vmatpush1.msra.mxu0 0.0
        %415 = vmatprep.subr.mxu0 0.0
        %416 = vmatpush1.msra.mxu0 0.0
        %417 = vmatprep.subr.mxu0 0.0
        %418 = vmatpush1.msra.mxu0 0.0
        %419 = vmatprep.subr.mxu0 0.0
        %420 = vmatpush1.msra.mxu0 0.0
        %421 = vmatprep.subr.mxu0 0.0
        %422 = vmatpush1.msra.mxu0 0.0
        %423 = vmatprep.subr.mxu0 0.0
        %424 = vmatpush1.msra.mxu0 0.0
        %425 = vmatprep.subr.mxu0 0.0
        %426 = vmatpush1.msra.mxu0 0.0
        %427 = vmatprep.subr.mxu0 0.0
        %428 = vmatpush1.msra.mxu0 0.0
        %429 = vmatprep.subr.mxu0 0.0
        %430 = vmatpush1.msra.mxu0 0.0
        %431 = vmatprep.subr.mxu0 0.0
        %432 = vmatpush1.msra.mxu0 0.0
        %433 = vmatprep.subr.mxu0 0.0
        %434 = vmatpush1.msra.mxu0 0.0
        %435 = vmatprep.subr.mxu0 0.0
        %436 = vmatpush1.msra.mxu0 0.0
        %437 = vmatprep.subr.mxu0 0.0
        %438 = vmatpush1.msra.mxu0 0.0
        %439 = vmatprep.mubr.f32.mxu0 0.0
        %440 = vmatmul.mubr.f32.gmra.mrb[0].mxu0 %v356
        %v441 = vpop.f32.mrb[0].mxu0
        %v442 = vadd.f32 0.0, %v441
        %v443 = vpop.f32.mrb[0].mxu0
        %444 = vmatprep.mubr.f32.mxu0 0.0
        %445 = vmatmul.mubr.f32.gmra.mrb[0].mxu0 %v357
        %v446 = vpop.f32.mrb[0].mxu0
        %v447 = vadd.f32 0.0, %v446
        %v448 = vpop.f32.mrb[0].mxu0
        %449 = vdwg.mxu0
        %v450 = vadd.f32 %v354, %v442
        %v451 = vadd.f32 %v355, %v447
        %v452 = vld [vmem:[%s252 + $0x2] sm:$0xff]
        %v453 = vld [vmem:[%s252 + $0xa] sm:$0xff]
        %s454 = scalar_lea.vmem [#allocation3], 256
        %v455 = vld [vmem:[%s454] sm:$0xff]
        %v456 = vld [vmem:[%s454 + $0x8] sm:$0xff]
        %v457 = vld [vmem:[%s454 + $0x10] sm:$0xff]
        %v458 = vld [vmem:[%s454 + $0x18] sm:$0xff]
        %v459 = vld [vmem:[%s454 + $0x20] sm:$0xff]
        %v460 = vld [vmem:[%s454 + $0x28] sm:$0xff]
        %v461 = vld [vmem:[%s454 + $0x30] sm:$0xff]
        %v462 = vld [vmem:[%s454 + $0x38] sm:$0xff]
        %v463 = vld [vmem:[%s454 + $0x40] sm:$0xff]
        %v464 = vld [vmem:[%s454 + $0x48] sm:$0xff]
        %v465 = vld [vmem:[%s454 + $0x50] sm:$0xff]
        %v466 = vld [vmem:[%s454 + $0x58] sm:$0xff]
        %v467 = vld [vmem:[%s454 + $0x60] sm:$0xff]
        %v468 = vld [vmem:[%s454 + $0x68] sm:$0xff]
        %v469 = vld [vmem:[%s454 + $0x70] sm:$0xff]
        %v470 = vld [vmem:[%s454 + $0x78] sm:$0xff]
        %471 = vmatprep.subr.mxu0 0.0
        %472 = vmatpush1.msra.mxu0 %v455
        %473 = vmatprep.subr.mxu0 0.0
        %474 = vmatpush1.msra.mxu0 %v456
        %475 = vmatprep.subr.mxu0 0.0
        %476 = vmatpush1.msra.mxu0 %v457
        %477 = vmatprep.subr.mxu0 0.0
        %478 = vmatpush1.msra.mxu0 %v458
        %479 = vmatprep.subr.mxu0 0.0
        %480 = vmatpush1.msra.mxu0 %v459
        %481 = vmatprep.subr.mxu0 0.0
        %482 = vmatpush1.msra.mxu0 %v460
        %483 = vmatprep.subr.mxu0 0.0
        %484 = vmatpush1.msra.mxu0 %v461
        %485 = vmatprep.subr.mxu0 0.0
        %486 = vmatpush1.msra.mxu0 %v462
        %487 = vmatprep.subr.mxu0 0.0
        %488 = vmatpush1.msra.mxu0 %v463
        %489 = vmatprep.subr.mxu0 0.0
        %490 = vmatpush1.msra.mxu0 %v464
        %491 = vmatprep.subr.mxu0 0.0
        %492 = vmatpush1.msra.mxu0 %v465
        %493 = vmatprep.subr.mxu0 0.0
        %494 = vmatpush1.msra.mxu0 %v466
        %495 = vmatprep.subr.mxu0 0.0
        %496 = vmatpush1.msra.mxu0 %v467
        %497 = vmatprep.subr.mxu0 0.0
        %498 = vmatpush1.msra.mxu0 %v468
        %499 = vmatprep.subr.mxu0 0.0
        %500 = vmatpush1.msra.mxu0 %v469
        %501 = vmatprep.subr.mxu0 0.0
        %502 = vmatpush1.msra.mxu0 %v470
        %503 = vmatprep.subr.mxu0 0.0
        %504 = vmatpush1.msra.mxu0 0.0
        %505 = vmatprep.subr.mxu0 0.0
        %506 = vmatpush1.msra.mxu0 0.0
        %507 = vmatprep.subr.mxu0 0.0
        %508 = vmatpush1.msra.mxu0 0.0
        %509 = vmatprep.subr.mxu0 0.0
        %510 = vmatpush1.msra.mxu0 0.0
        %511 = vmatprep.subr.mxu0 0.0
        %512 = vmatpush1.msra.mxu0 0.0
        %513 = vmatprep.subr.mxu0 0.0
        %514 = vmatpush1.msra.mxu0 0.0
        %515 = vmatprep.subr.mxu0 0.0
        %516 = vmatpush1.msra.mxu0 0.0
        %517 = vmatprep.subr.mxu0 0.0
        %518 = vmatpush1.msra.mxu0 0.0
        %519 = vmatprep.subr.mxu0 0.0
        %520 = vmatpush1.msra.mxu0 0.0
        %521 = vmatprep.subr.mxu0 0.0
        %522 = vmatpush1.msra.mxu0 0.0
        %523 = vmatprep.subr.mxu0 0.0
        %524 = vmatpush1.msra.mxu0 0.0
        %525 = vmatprep.subr.mxu0 0.0
        %526 = vmatpush1.msra.mxu0 0.0
        %527 = vmatprep.subr.mxu0 0.0
        %528 = vmatpush1.msra.mxu0 0.0
        %529 = vmatprep.subr.mxu0 0.0
        %530 = vmatpush1.msra.mxu0 0.0
        %531 = vmatprep.subr.mxu0 0.0
        %532 = vmatpush1.msra.mxu0 0.0
        %533 = vmatprep.subr.mxu0 0.0
        %534 = vmatpush1.msra.mxu0 0.0
        %535 = vmatprep.mubr.f32.mxu0 0.0
        %536 = vmatmul.mubr.f32.gmra.mrb[0].mxu0 %v452
        %v537 = vpop.f32.mrb[0].mxu0
        %v538 = vadd.f32 0.0, %v537
        %v539 = vpop.f32.mrb[0].mxu0
        %540 = vmatprep.mubr.f32.mxu0 0.0
        %541 = vmatmul.mubr.f32.gmra.mrb[0].mxu0 %v453
        %v542 = vpop.f32.mrb[0].mxu0
        %v543 = vadd.f32 0.0, %v542
        %v544 = vpop.f32.mrb[0].mxu0
        %545 = vdwg.mxu0
        %v546 = vadd.f32 %v450, %v538
        %v547 = vadd.f32 %v451, %v543
        %v548 = vsub.f32 0.0, %v546
        %v549 = vsub.f32 0.0, %v547
        %v550 = vmul.f32 %v548, 1.442695
        %v551 = vpow.pop %v550
        %v552 = vmul.f32 %v549, 1.442695
        %v553 = vpow.pop %v552
        %v554 = vadd.f32 %v551, 1.0
        %v555 = vadd.f32 %v553, 1.0
        %v556 = vrcp.pop %v554
        %v557 = vmul.f32 1.0, %v556
        %v558 = vrcp.pop %v555
        %v559 = vmul.f32 1.0, %v558
        %v560 = vmul.f32 %v546, %v557
        %v561 = vmul.f32 %v547, %v559
        %562 = vst [vmem:[#allocation2] sm:$0x1] 0.0
        %563 = vst [vmem:[#allocation2 + $0x11] sm:$0x1] 0.0
        %564 = vst [vmem:[#allocation2 + $0x1] sm:$0xff] %v560
        %565 = vst [vmem:[#allocation2 + $0x9] sm:$0xff] %v561
        %v566 = vld [vmem:[%s4] sm:$0x1]
        %v568 = vlaneseq
        %v569 = vshrl.u32 %v568, 7
        %v570 = vsub.s32 0, %v569
        %v571 = vrot.slane %v566, %v570
        %v573 = vadd.f32 %v571, 0.0
        %v574 = vld [vmem:[#allocation2] sm:$0xff]
        %v575 = vld [vmem:[#allocation2 + $0x8] sm:$0xff]
        %v576 = vld [vmem:[#allocation6] sm:$0xff]
        %v577 = vld [vmem:[#allocation6 + $0x8] sm:$0xff]
        %v578 = vld [vmem:[#allocation6 + $0x10] sm:$0xff]
        %v579 = vld [vmem:[#allocation6 + $0x18] sm:$0xff]
        %v580 = vld [vmem:[#allocation6 + $0x20] sm:$0xff]
        %v581 = vld [vmem:[#allocation6 + $0x28] sm:$0xff]
        %v582 = vld [vmem:[#allocation6 + $0x30] sm:$0xff]
        %v583 = vld [vmem:[#allocation6 + $0x38] sm:$0xff]
        %v584 = vld [vmem:[#allocation6 + $0x40] sm:$0xff]
        %v585 = vld [vmem:[#allocation6 + $0x48] sm:$0xff]
        %v586 = vld [vmem:[#allocation6 + $0x50] sm:$0xff]
        %v587 = vld [vmem:[#allocation6 + $0x58] sm:$0xff]
        %v588 = vld [vmem:[#allocation6 + $0x60] sm:$0xff]
        %v589 = vld [vmem:[#allocation6 + $0x68] sm:$0xff]
        %v590 = vld [vmem:[#allocation6 + $0x70] sm:$0xff]
        %v591 = vld [vmem:[#allocation6 + $0x78] sm:$0xff]
        %592 = vmatprep.subr.mxu0 0.0
        %593 = vmatpush1.msra.mxu0 %v576
        %594 = vmatprep.subr.mxu0 0.0
        %595 = vmatpush1.msra.mxu0 %v577
        %596 = vmatprep.subr.mxu0 0.0
        %597 = vmatpush1.msra.mxu0 %v578
        %598 = vmatprep.subr.mxu0 0.0
        %599 = vmatpush1.msra.mxu0 %v579
        %600 = vmatprep.subr.mxu0 0.0
        %601 = vmatpush1.msra.mxu0 %v580
        %602 = vmatprep.subr.mxu0 0.0
        %603 = vmatpush1.msra.mxu0 %v581
        %604 = vmatprep.subr.mxu0 0.0
        %605 = vmatpush1.msra.mxu0 %v582
        %606 = vmatprep.subr.mxu0 0.0
        %607 = vmatpush1.msra.mxu0 %v583
        %608 = vmatprep.subr.mxu0 0.0
        %609 = vmatpush1.msra.mxu0 %v584
        %610 = vmatprep.subr.mxu0 0.0
        %611 = vmatpush1.msra.mxu0 %v585
        %612 = vmatprep.subr.mxu0 0.0
        %613 = vmatpush1.msra.mxu0 %v586
        %614 = vmatprep.subr.mxu0 0.0
        %615 = vmatpush1.msra.mxu0 %v587
        %616 = vmatprep.subr.mxu0 0.0
        %617 = vmatpush1.msra.mxu0 %v588
        %618 = vmatprep.subr.mxu0 0.0
        %619 = vmatpush1.msra.mxu0 %v589
        %620 = vmatprep.subr.mxu0 0.0
        %621 = vmatpush1.msra.mxu0 %v590
        %622 = vmatprep.subr.mxu0 0.0
        %623 = vmatpush1.msra.mxu0 %v591
        %624 = vmatprep.subr.mxu0 0.0
        %625 = vmatpush1.msra.mxu0 0.0
        %626 = vmatprep.subr.mxu0 0.0
        %627 = vmatpush1.msra.mxu0 0.0
        %628 = vmatprep.subr.mxu0 0.0
        %629 = vmatpush1.msra.mxu0 0.0
        %630 = vmatprep.subr.mxu0 0.0
        %631 = vmatpush1.msra.mxu0 0.0
        %632 = vmatprep.subr.mxu0 0.0
        %633 = vmatpush1.msra.mxu0 0.0
        %634 = vmatprep.subr.mxu0 0.0
        %635 = vmatpush1.msra.mxu0 0.0
        %636 = vmatprep.subr.mxu0 0.0
        %637 = vmatpush1.msra.mxu0 0.0
        %638 = vmatprep.subr.mxu0 0.0
        %639 = vmatpush1.msra.mxu0 0.0
        %640 = vmatprep.subr.mxu0 0.0
        %641 = vmatpush1.msra.mxu0 0.0
        %642 = vmatprep.subr.mxu0 0.0
        %643 = vmatpush1.msra.mxu0 0.0
        %644 = vmatprep.subr.mxu0 0.0
        %645 = vmatpush1.msra.mxu0 0.0
        %646 = vmatprep.subr.mxu0 0.0
        %647 = vmatpush1.msra.mxu0 0.0
        %648 = vmatprep.subr.mxu0 0.0
        %649 = vmatpush1.msra.mxu0 0.0
        %650 = vmatprep.subr.mxu0 0.0
        %651 = vmatpush1.msra.mxu0 0.0
        %652 = vmatprep.subr.mxu0 0.0
        %653 = vmatpush1.msra.mxu0 0.0
        %654 = vmatprep.subr.mxu0 0.0
        %655 = vmatpush1.msra.mxu0 0.0
        %656 = vmatprep.mubr.f32.mxu0 0.0
        %657 = vmatmul.mubr.f32.gmra.mrb[0].mxu0 %v574
        %v658 = vpop.f32.mrb[0].mxu0
        %v659 = vadd.f32 0.0, %v658
        %v660 = vpop.f32.mrb[0].mxu0
        %661 = vmatprep.mubr.f32.mxu0 0.0
        %662 = vmatmul.mubr.f32.gmra.mrb[0].mxu0 %v575
        %v663 = vpop.f32.mrb[0].mxu0
        %v664 = vadd.f32 0.0, %v663
        %v665 = vpop.f32.mrb[0].mxu0
        %666 = vdwg.mxu0
        %v667 = vadd.f32 %v573, %v659
        %v668 = vadd.f32 %v573, %v664
        %v669 = vld [vmem:[#allocation2 + $0x1] sm:$0xff]
        %v670 = vld [vmem:[#allocation2 + $0x9] sm:$0xff]
        %s671 = scalar_lea.vmem [#allocation6], 128
        %v672 = vld [vmem:[%s671] sm:$0xff]
        %v673 = vld [vmem:[%s671 + $0x8] sm:$0xff]
        %v674 = vld [vmem:[%s671 + $0x10] sm:$0xff]
        %v675 = vld [vmem:[%s671 + $0x18] sm:$0xff]
        %v676 = vld [vmem:[%s671 + $0x20] sm:$0xff]
        %v677 = vld [vmem:[%s671 + $0x28] sm:$0xff]
        %v678 = vld [vmem:[%s671 + $0x30] sm:$0xff]
        %v679 = vld [vmem:[%s671 + $0x38] sm:$0xff]
        %v680 = vld [vmem:[%s671 + $0x40] sm:$0xff]
        %v681 = vld [vmem:[%s671 + $0x48] sm:$0xff]
        %v682 = vld [vmem:[%s671 + $0x50] sm:$0xff]
        %v683 = vld [vmem:[%s671 + $0x58] sm:$0xff]
        %v684 = vld [vmem:[%s671 + $0x60] sm:$0xff]
        %v685 = vld [vmem:[%s671 + $0x68] sm:$0xff]
        %v686 = vld [vmem:[%s671 + $0x70] sm:$0xff]
        %v687 = vld [vmem:[%s671 + $0x78] sm:$0xff]
        %688 = vmatprep.subr.mxu0 0.0
        %689 = vmatpush1.msra.mxu0 %v672
        %690 = vmatprep.subr.mxu0 0.0
        %691 = vmatpush1.msra.mxu0 %v673
        %692 = vmatprep.subr.mxu0 0.0
        %693 = vmatpush1.msra.mxu0 %v674
        %694 = vmatprep.subr.mxu0 0.0
        %695 = vmatpush1.msra.mxu0 %v675
        %696 = vmatprep.subr.mxu0 0.0
        %697 = vmatpush1.msra.mxu0 %v676
        %698 = vmatprep.subr.mxu0 0.0
        %699 = vmatpush1.msra.mxu0 %v677
        %700 = vmatprep.subr.mxu0 0.0
        %701 = vmatpush1.msra.mxu0 %v678
        %702 = vmatprep.subr.mxu0 0.0
        %703 = vmatpush1.msra.mxu0 %v679
        %704 = vmatprep.subr.mxu0 0.0
        %705 = vmatpush1.msra.mxu0 %v680
        %706 = vmatprep.subr.mxu0 0.0
        %707 = vmatpush1.msra.mxu0 %v681
        %708 = vmatprep.subr.mxu0 0.0
        %709 = vmatpush1.msra.mxu0 %v682
        %710 = vmatprep.subr.mxu0 0.0
        %711 = vmatpush1.msra.mxu0 %v683
        %712 = vmatprep.subr.mxu0 0.0
        %713 = vmatpush1.msra.mxu0 %v684
        %714 = vmatprep.subr.mxu0 0.0
        %715 = vmatpush1.msra.mxu0 %v685
        %716 = vmatprep.subr.mxu0 0.0
        %717 = vmatpush1.msra.mxu0 %v686
        %718 = vmatprep.subr.mxu0 0.0
        %719 = vmatpush1.msra.mxu0 %v687
        %720 = vmatprep.subr.mxu0 0.0
        %721 = vmatpush1.msra.mxu0 0.0
        %722 = vmatprep.subr.mxu0 0.0
        %723 = vmatpush1.msra.mxu0 0.0
        %724 = vmatprep.subr.mxu0 0.0
        %725 = vmatpush1.msra.mxu0 0.0
        %726 = vmatprep.subr.mxu0 0.0
        %727 = vmatpush1.msra.mxu0 0.0
        %728 = vmatprep.subr.mxu0 0.0
        %729 = vmatpush1.msra.mxu0 0.0
        %730 = vmatprep.subr.mxu0 0.0
        %731 = vmatpush1.msra.mxu0 0.0
        %732 = vmatprep.subr.mxu0 0.0
        %733 = vmatpush1.msra.mxu0 0.0
        %734 = vmatprep.subr.mxu0 0.0
        %735 = vmatpush1.msra.mxu0 0.0
        %736 = vmatprep.subr.mxu0 0.0
        %737 = vmatpush1.msra.mxu0 0.0
        %738 = vmatprep.subr.mxu0 0.0
        %739 = vmatpush1.msra.mxu0 0.0
        %740 = vmatprep.subr.mxu0 0.0
        %741 = vmatpush1.msra.mxu0 0.0
        %742 = vmatprep.subr.mxu0 0.0
        %743 = vmatpush1.msra.mxu0 0.0
        %744 = vmatprep.subr.mxu0 0.0
        %745 = vmatpush1.msra.mxu0 0.0
        %746 = vmatprep.subr.mxu0 0.0
        %747 = vmatpush1.msra.mxu0 0.0
        %748 = vmatprep.subr.mxu0 0.0
        %749 = vmatpush1.msra.mxu0 0.0
        %750 = vmatprep.subr.mxu0 0.0
        %751 = vmatpush1.msra.mxu0 0.0
        %752 = vmatprep.mubr.f32.mxu0 0.0
        %753 = vmatmul.mubr.f32.gmra.mrb[0].mxu0 %v669
        %v754 = vpop.f32.mrb[0].mxu0
        %v755 = vadd.f32 0.0, %v754
        %v756 = vpop.f32.mrb[0].mxu0
        %757 = vmatprep.mubr.f32.mxu0 0.0
        %758 = vmatmul.mubr.f32.gmra.mrb[0].mxu0 %v670
        %v759 = vpop.f32.mrb[0].mxu0
        %v760 = vadd.f32 0.0, %v759
        %v761 = vpop.f32.mrb[0].mxu0
        %762 = vdwg.mxu0
        %v763 = vadd.f32 %v667, %v755
        %v764 = vadd.f32 %v668, %v760
        %v765 = vld [vmem:[#allocation2 + $0x2] sm:$0xff]
        %v766 = vld [vmem:[#allocation2 + $0xa] sm:$0xff]
        %s767 = scalar_lea.vmem [#allocation6], 256
        %v768 = vld [vmem:[%s767] sm:$0xff]
        %v769 = vld [vmem:[%s767 + $0x8] sm:$0xff]
        %v770 = vld [vmem:[%s767 + $0x10] sm:$0xff]
        %v771 = vld [vmem:[%s767 + $0x18] sm:$0xff]
        %v772 = vld [vmem:[%s767 + $0x20] sm:$0xff]
        %v773 = vld [vmem:[%s767 + $0x28] sm:$0xff]
        %v774 = vld [vmem:[%s767 + $0x30] sm:$0xff]
        %v775 = vld [vmem:[%s767 + $0x38] sm:$0xff]
        %v776 = vld [vmem:[%s767 + $0x40] sm:$0xff]
        %v777 = vld [vmem:[%s767 + $0x48] sm:$0xff]
        %v778 = vld [vmem:[%s767 + $0x50] sm:$0xff]
        %v779 = vld [vmem:[%s767 + $0x58] sm:$0xff]
        %v780 = vld [vmem:[%s767 + $0x60] sm:$0xff]
        %v781 = vld [vmem:[%s767 + $0x68] sm:$0xff]
        %v782 = vld [vmem:[%s767 + $0x70] sm:$0xff]
        %v783 = vld [vmem:[%s767 + $0x78] sm:$0xff]
        %784 = vmatprep.subr.mxu0 0.0
        %785 = vmatpush1.msra.mxu0 %v768
        %786 = vmatprep.subr.mxu0 0.0
        %787 = vmatpush1.msra.mxu0 %v769
        %788 = vmatprep.subr.mxu0 0.0
        %789 = vmatpush1.msra.mxu0 %v770
        %790 = vmatprep.subr.mxu0 0.0
        %791 = vmatpush1.msra.mxu0 %v771
        %792 = vmatprep.subr.mxu0 0.0
        %793 = vmatpush1.msra.mxu0 %v772
        %794 = vmatprep.subr.mxu0 0.0
        %795 = vmatpush1.msra.mxu0 %v773
        %796 = vmatprep.subr.mxu0 0.0
        %797 = vmatpush1.msra.mxu0 %v774
        %798 = vmatprep.subr.mxu0 0.0
        %799 = vmatpush1.msra.mxu0 %v775
        %800 = vmatprep.subr.mxu0 0.0
        %801 = vmatpush1.msra.mxu0 %v776
        %802 = vmatprep.subr.mxu0 0.0
        %803 = vmatpush1.msra.mxu0 %v777
        %804 = vmatprep.subr.mxu0 0.0
        %805 = vmatpush1.msra.mxu0 %v778
        %806 = vmatprep.subr.mxu0 0.0
        %807 = vmatpush1.msra.mxu0 %v779
        %808 = vmatprep.subr.mxu0 0.0
        %809 = vmatpush1.msra.mxu0 %v780
        %810 = vmatprep.subr.mxu0 0.0
        %811 = vmatpush1.msra.mxu0 %v781
        %812 = vmatprep.subr.mxu0 0.0
        %813 = vmatpush1.msra.mxu0 %v782
        %814 = vmatprep.subr.mxu0 0.0
        %815 = vmatpush1.msra.mxu0 %v783
        %816 = vmatprep.subr.mxu0 0.0
        %817 = vmatpush1.msra.mxu0 0.0
        %818 = vmatprep.subr.mxu0 0.0
        %819 = vmatpush1.msra.mxu0 0.0
        %820 = vmatprep.subr.mxu0 0.0
        %821 = vmatpush1.msra.mxu0 0.0
        %822 = vmatprep.subr.mxu0 0.0
        %823 = vmatpush1.msra.mxu0 0.0
        %824 = vmatprep.subr.mxu0 0.0
        %825 = vmatpush1.msra.mxu0 0.0
        %826 = vmatprep.subr.mxu0 0.0
        %827 = vmatpush1.msra.mxu0 0.0
        %828 = vmatprep.subr.mxu0 0.0
        %829 = vmatpush1.msra.mxu0 0.0
        %830 = vmatprep.subr.mxu0 0.0
        %831 = vmatpush1.msra.mxu0 0.0
        %832 = vmatprep.subr.mxu0 0.0
        %833 = vmatpush1.msra.mxu0 0.0
        %834 = vmatprep.subr.mxu0 0.0
        %835 = vmatpush1.msra.mxu0 0.0
        %836 = vmatprep.subr.mxu0 0.0
        %837 = vmatpush1.msra.mxu0 0.0
        %838 = vmatprep.subr.mxu0 0.0
        %839 = vmatpush1.msra.mxu0 0.0
        %840 = vmatprep.subr.mxu0 0.0
        %841 = vmatpush1.msra.mxu0 0.0
        %842 = vmatprep.subr.mxu0 0.0
        %843 = vmatpush1.msra.mxu0 0.0
        %844 = vmatprep.subr.mxu0 0.0
        %845 = vmatpush1.msra.mxu0 0.0
        %846 = vmatprep.subr.mxu0 0.0
        %847 = vmatpush1.msra.mxu0 0.0
        %848 = vmatprep.mubr.f32.mxu0 0.0
        %849 = vmatmul.mubr.f32.gmra.mrb[0].mxu0 %v765
        %v850 = vpop.f32.mrb[0].mxu0
        %v851 = vadd.f32 0.0, %v850
        %v852 = vpop.f32.mrb[0].mxu0
        %853 = vmatprep.mubr.f32.mxu0 0.0
        %854 = vmatmul.mubr.f32.gmra.mrb[0].mxu0 %v766
        %v855 = vpop.f32.mrb[0].mxu0
        %v856 = vadd.f32 0.0, %v855
        %v857 = vpop.f32.mrb[0].mxu0
        %858 = vdwg.mxu0
        %v859 = vadd.f32 %v763, %v851
        %v860 = vadd.f32 %v764, %v856
        %v861 = vld [vmem:[%s252 + $0x1] sm:$0xff]
        %v862 = vld [vmem:[%s252 + $0x9] sm:$0xff]
        %v863 = vadd.f32 %v859, %v861
        %v864 = vadd.f32 %v860, %v862
        %865 = vst [vmem:[%s247] sm:$0xff] %v863
        %866 = vst [vmem:[%s247 + $0x8] sm:$0xff] %v864
        %s867 = sand.u32 %s139, 1
        %s868 = scalar_lea.sflag [#allocation5], %s867
        %s869 = sand.u32 %s139, 1
        %s870 = smul.addr %s869, 16
        %s871 = scalar_lea.vmem [#allocation8], %s870
        // Predicated region
        $region49: #{tpu_custom_call.1} parent=39 // pred_check
          %p872 = pneg %p149
        $region50: #{tpu_custom_call.1} parent=39 // pred_check_branch
          %874 = sbr.rel (%p872) target = $region52
        $region51: #{tpu_custom_call.1} parent=39 // pred_region
          %s876 = ssub.s32 256, 256
          %877 = vsyncadd %s868, %s876
          %s878 = smul.addr %s21, 2
          %s879 = smul.addr %s878, 128
          %s880 = scalar_lea.hbm %s5, %s879
          %s881 = sshll.u32 %s871, 4
          %s882 = int_to_ptr.vmem [resolvable:$true] %s881
          %887 = dma.vmem_to_hbm [thread:$0]  %s882, 256, %s880, %s868, 128, 128, 8
        $region52: #{tpu_custom_call.1} parent=39 // pred_fallthru
          _
      $region40: #{tpu_custom_call.1} parent=5 // pred_fallthru
        _
      %p888 = scmp.le.s32.totalorder 2, %s16
      // Predicated region
      $region53: #{tpu_custom_call.1} parent=5 // pred_check
        %p889 = pneg %p888
      $region54: #{tpu_custom_call.1} parent=5 // pred_check_branch
        %891 = sbr.rel (%p889) target = $region56
      $region55: #{tpu_custom_call.1} parent=5 // pred_region
        %s892 = ssub.s32 %s16, 2
        // Predicated region
        $region57: #{tpu_custom_call.1} parent=55 // pred_check
          %p893 = pneg %p155
        $region58: #{tpu_custom_call.1} parent=55 // pred_check_branch
          %895 = sbr.rel (%p893) target = $region60
        $region59: #{tpu_custom_call.1} parent=55 // pred_region
          %s896 = sand.u32 %s140, 1
          %s897 = scalar_lea.sflag [#allocation5], %s896
          %s898 = sand.u32 %s140, 1
          %s899 = smul.addr %s898, 16
          %s900 = scalar_lea.vmem [#allocation8], %s899
          %901 = dma.done %s897, 256
        $region60: #{tpu_custom_call.1} parent=55 // pred_fallthru
          _
      $region56: #{tpu_custom_call.1} parent=5 // pred_fallthru
        _
    $region6: #{tpu_custom_call.1} parent=1 // loop_footer
      %s20 = sadd.s32 1, %s16
    $region7: #{tpu_custom_call.1} parent=1 // loop_footer_branch
      %15 = sbr.rel target = $region3
    $region8: #{tpu_custom_call.1} parent=1 // loop_exit
      _
    %902 = vsyncpa [#allocation4], 1
    %s903 = scalar_lea.sflag [#allocation4], 1
    %904 = vsyncpa %s903, 1
    %905 = vsyncpa [#allocation7], 1
    %906 = vsyncpa [#allocation5], 1
    %s907 = scalar_lea.sflag [#allocation5], 1
    %908 = vsyncpa %s907, 1

</llo_original>
